<compile_context>
chip_gen: v6e
topology: v6e:2x2x1
jax: 0.10.0
libtpu: 0.0.40
codegen_flags: <defaults>
</compile_context>

<pallas_src>
import math
import functools

import jax
import jax.numpy as jnp
from jax.experimental import pallas as pl
from jax.experimental.pallas import tpu as pltpu

VMEM_LIMIT_BYTES = 64 * 1024 * 1024  # explicit scoped-VMEM budget (fits v7x physical VMEM)


# ---------------------------------------------------------------------------
# Kernel 1: M/N/K-tiled dense layer   y = x @ W + b   (W pre-transposed to (d_in, d_out))
#   grid = (M tiles, N tiles, K tiles); f32 accumulator scratch, K axis "arbitrary".
# ---------------------------------------------------------------------------
def _linear_kernel(x_ref, w_ref, b_ref, o_ref, acc_ref):
    @pl.when(pl.program_id(2) == 0)
    def _():
        acc_ref[...] = jnp.zeros_like(acc_ref)

    # bf16 MXU inputs (W stored bf16 at prepare time; x cast here), f32 accumulation.
    x = x_ref[...].astype(w_ref.dtype)
    acc_ref[...] += jnp.dot(x, w_ref[...], preferred_element_type=jnp.float32)

    @pl.when(pl.program_id(2) == pl.num_programs(2) - 1)
    def _():
        o_ref[...] = (acc_ref[...] + b_ref[...].astype(jnp.float32)).astype(o_ref.dtype)


def linear(x2d, w_t, b, *, tile_m=256, tile_n=512, tile_k=512, out_dtype=None):
    """x2d: (N, d_in), w_t: (d_in, d_out), b: (d_out,) -> (N, d_out) in out_dtype."""
    n, d_in = x2d.shape
    d_out = w_t.shape[1]
    out_dtype = x2d.dtype if out_dtype is None else out_dtype
    tm = min(tile_m, n)
    tn = min(tile_n, d_out)
    tk = min(tile_k, d_in)
    grid = (pl.cdiv(n, tm), pl.cdiv(d_out, tn), pl.cdiv(d_in, tk))
    return pl.pallas_call(
        _linear_kernel,
        out_shape=jax.ShapeDtypeStruct((n, d_out), out_dtype),
        grid=grid,
        in_specs=[
            pl.BlockSpec((tm, tk), lambda i, j, k: (i, k)),   # x tile
            pl.BlockSpec((tk, tn), lambda i, j, k: (k, j)),   # W tile (never fully resident)
            pl.BlockSpec((1, tn), lambda i, j, k: (0, j)),    # bias tile
        ],
        out_specs=pl.BlockSpec((tm, tn), lambda i, j, k: (i, j)),
        scratch_shapes=[pltpu.VMEM((tm, tn), jnp.float32)],
        compiler_params=pltpu.CompilerParams(
            dimension_semantics=("parallel", "parallel", "arbitrary"),
            vmem_limit_bytes=VMEM_LIMIT_BYTES),
    )(x2d, w_t, b.reshape(1, d_out))


# ---------------------------------------------------------------------------
# Kernel 2: scaled dot-product attention, heads as a grid axis
#   grid = (B, H, Sq // TILE_Q); q block (1,1,tq,d_k), K/V blocks (1,1,Sk,d_k).
#   1/sqrt(d_k) is already folded into the Q projection, so no in-kernel scale.
# ---------------------------------------------------------------------------
def _mha_sdpa_kernel(q_ref, k_ref, v_ref, o_ref, *opt_refs, need_weights):
    attn_ref = opt_refs[0] if need_weights else None

    q = q_ref[0, 0]   # (tq, d_k)  -- bf16 (or f32) MXU operand
    k = k_ref[0, 0]   # (Sk, d_k)
    v = v_ref[0, 0]   # (Sk, d_k)

    # q @ k^T via dot_general contraction on last dims (no materialized transpose).
    # Note: for d_k <= 64 the single EUP (exp over tq*Sk) is usually the binding unit,
    # not the MXU, so keep the softmax math lean and in f32.
    s = jax.lax.dot_general(q, k, (((1,), (1,)), ((), ())),
                            preferred_element_type=jnp.float32)          # (tq, Sk) f32
    m = jnp.max(s, axis=-1, keepdims=True)
    e = jnp.exp(s - m)
    denom = jnp.sum(e, axis=-1, keepdims=True)

    if need_weights:
        p = e / denom                                   # exact reciprocal: PyTorch-parity weights
        attn_ref[0, 0] = p.astype(attn_ref.dtype)
    else:
        p = e * pl.reciprocal(denom, approx=True)       # EUP slot, nearly free

    o_ref[0, 0] = jnp.dot(p.astype(v.dtype), v,
                          preferred_element_type=jnp.float32).astype(o_ref.dtype)


def scaled_dot_product_attention_heads(q, k, v, *, tile_q=256, need_weights=False,
                                       weights_dtype=jnp.float32):
    """q: (B, H, Sq, d_k), k/v: (B, H, Sk, d_k).
    Returns (out (B, H, Sq, d_k), attn (B, H, Sq, Sk) or None)."""
    B, H, Sq, d_k = q.shape
    Sk = k.shape[2]
    tq = min(tile_q, Sq)
    grid = (B, H, pl.cdiv(Sq, tq))

    kernel = functools.partial(_mha_sdpa_kernel, need_weights=need_weights)

    o_struct = jax.ShapeDtypeStruct((B, H, Sq, d_k), q.dtype)
    o_spec = pl.BlockSpec((1, 1, tq, d_k), lambda b, h, qi: (b, h, qi, 0))
    in_specs = [
        pl.BlockSpec((1, 1, tq, d_k), lambda b, h, qi: (b, h, qi, 0)),  # q row tile
        pl.BlockSpec((1, 1, Sk, d_k), lambda b, h, qi: (b, h, 0, 0)),   # full K for (b, h)
        pl.BlockSpec((1, 1, Sk, d_k), lambda b, h, qi: (b, h, 0, 0)),   # full V for (b, h)
    ]
    if need_weights:
        out_shape = (o_struct, jax.ShapeDtypeStruct((B, H, Sq, Sk), weights_dtype))
        out_specs = (o_spec,
                     pl.BlockSpec((1, 1, tq, Sk), lambda b, h, qi: (b, h, qi, 0)))
    else:
        out_shape = o_struct
        out_specs = o_spec

    res = pl.pallas_call(
        kernel,
        out_shape=out_shape,
        grid=grid,
        in_specs=in_specs,
        out_specs=out_specs,
        compiler_params=pltpu.CompilerParams(
            dimension_semantics=("parallel", "parallel", "parallel"),
            vmem_limit_bytes=VMEM_LIMIT_BYTES),
    )(q, k, v)

    if need_weights:
        return res[0], res[1]
    return res, None


# ---------------------------------------------------------------------------
# MultiHeadAttention forward (glue in plain JAX, hot paths in Pallas)
# ---------------------------------------------------------------------------
def multi_head_attention(params, query, key, value, *, tile_m=256, tile_n=512,
                         tile_k=512, tile_q=256, need_weights=True):
    """query: (B, Sq, d_model), key/value: (B, Sk, d_model).
    Returns (output (B, Sq, d_model), attn (B, H, Sq, Sk) or None).
    need_weights=True matches the PyTorch module (it returns attn); turning it off
    removes the dominant (B,H,Sq,Sk) HBM writeback."""
    B, Sq, d_model = query.shape
    Sk = key.shape[1]
    H = params["num_heads"]
    d_k = d_model // H
    act_dtype = params["wq_t"].dtype   # bf16 activations between kernels -> half the DMA bytes

    lin = functools.partial(linear, tile_m=tile_m, tile_n=tile_n, tile_k=tile_k)

    if (query is key) and (key is value):
        # Self-attention fast path: fused QKV projection (one matmul, one pallas_call).
        qkv = lin(query.reshape(B * Sq, d_model), params["wqkv_t"], params["bqkv"],
                  out_dtype=act_dtype).reshape(B, Sq, 3 * d_model)
        q_proj, k_proj, v_proj = jnp.split(qkv, 3, axis=-1)
    else:
        q_proj = lin(query.reshape(B * Sq, d_model), params["wq_t"], params["bq"],
                     out_dtype=act_dtype).reshape(B, Sq, d_model)
        k_proj = lin(key.reshape(B * Sk, d_model), params["wk_t"], params["bk"],
                     out_dtype=act_dtype).reshape(B, Sk, d_model)
        v_proj = lin(value.reshape(B * Sk, d_model), params["wv_t"], params["bv"],
                     out_dtype=act_dtype).reshape(B, Sk, d_model)

    # One XLA HBM transpose to (B, H, S, d_k): heads become a grid axis in the SDPA kernel.
    qh = q_proj.reshape(B, Sq, H, d_k).transpose(0, 2, 1, 3)
    kh = k_proj.reshape(B, Sk, H, d_k).transpose(0, 2, 1, 3)
    vh = v_proj.reshape(B, Sk, H, d_k).transpose(0, 2, 1, 3)

    out_h, attn = scaled_dot_product_attention_heads(
        qh, kh, vh, tile_q=tile_q, need_weights=need_weights,
        weights_dtype=query.dtype)

    out = out_h.transpose(0, 2, 1, 3).reshape(B, Sq, d_model)
    out = lin(out.reshape(B * Sq, d_model), params["wo_t"], params["bo"],
              out_dtype=query.dtype).reshape(B, Sq, d_model)
    return out, attn


# ---------------------------------------------------------------------------
# Parameter handling
# ---------------------------------------------------------------------------
def init_params(key, d_model, num_heads):
    """PyTorch-convention weights: W (out_features, in_features), b (out_features,)."""
    ks = jax.random.split(key, 8)
    bound = 1.0 / math.sqrt(d_model)   # nn.Linear default init range

    def w(k):
        return jax.random.uniform(k, (d_model, d_model), jnp.float32, -bound, bound)

    def b(k):
        return jax.random.uniform(k, (d_model,), jnp.float32, -bound, bound)

    return {
        "num_heads": num_heads,
        "wq": w(ks[0]), "bq": b(ks[1]),
        "wk": w(ks[2]), "bk": b(ks[3]),
        "wv": w(ks[4]), "bv": b(ks[5]),
        "wo": w(ks[6]), "bo": b(ks[7]),
    }


def prepare_params(p, *, compute_dtype=jnp.bfloat16):
    """One-time layout/precision prep:
      - transpose weights to (d_in, d_out) and cast to compute_dtype (bf16 MXU operands),
      - fold 1/sqrt(d_k) into the Q projection weights/bias,
      - build the fused QKV weight for the self-attention path.
    Biases stay f32 (added after the f32 accumulation)."""
    H = p["num_heads"]
    d_model = p["wq"].shape[0]
    d_k = d_model // H
    scale = 1.0 / math.sqrt(d_k)
    wdt = p["wq"].dtype if compute_dtype is None else compute_dtype

    wq_s = p["wq"] * scale
    bq_s = p["bq"] * scale

    return {
        "num_heads": H,
        "wq_t": wq_s.T.astype(wdt), "bq": bq_s,
        "wk_t": p["wk"].T.astype(wdt), "bk": p["bk"],
        "wv_t": p["wv"].T.astype(wdt), "bv": p["bv"],
        "wo_t": p["wo"].T.astype(wdt), "bo": p["bo"],
        "wqkv_t": jnp.concatenate([wq_s, p["wk"], p["wv"]], axis=0).T.astype(wdt),
        "bqkv": jnp.concatenate([bq_s, p["bk"], p["bv"]]),
    }


# ---------------------------------------------------------------------------
# Pure-JAX reference (matches the PyTorch module, eval-mode dropout)
# ---------------------------------------------------------------------------
def ref_forward(p, q, k, v, num_heads):
    d_model = q.shape[-1]
    d_k = d_model // num_heads
    B, Sq, _ = q.shape
    Sk = k.shape[1]

    def lin(x, w, b):
        return x @ w.T + b

    qh = lin(q, p["wq"], p["bq"]).reshape(B, Sq, num_heads, d_k).transpose(0, 2, 1, 3)
    kh = lin(k, p["wk"], p["bk"]).reshape(B, Sk, num_heads, d_k).transpose(0, 2, 1, 3)
    vh = lin(v, p["wv"], p["bv"]).reshape(B, Sk, num_heads, d_k).transpose(0, 2, 1, 3)
    sc = jnp.einsum("bhqd,bhkd->bhqk", qh, kh) / math.sqrt(d_k)
    a = jax.nn.softmax(sc, axis=-1)
    o = jnp.einsum("bhqk,bhkd->bhqd", a, vh).transpose(0, 2, 1, 3).reshape(B, Sq, d_model)
    return lin(o, p["wo"], p["bo"]), a


if __name__ == "__main__":
    B, S, d_model, num_heads = 2, 8, 32, 4

    root = jax.random.PRNGKey(0)
    k_params, kx, kq, kk, kv = jax.random.split(root, 5)

    torch_params = init_params(k_params, d_model, num_heads)
    params = prepare_params(torch_params)          # bf16 weights, scale folded into Wq

    # bf16 MXU inputs -> tolerances loosened accordingly (f32 accumulation throughout).
    ATOL = RTOL = 2e-2

    # ---- case 1: self-attention (exercises the fused-QKV path) ----
    x = jax.random.normal(kx, (B, S, d_model), jnp.float32)
    out1, attn1 = multi_head_attention(params, x, x, x)
    out1 = jax.block_until_ready(out1)
    attn1 = jax.block_until_ready(attn1)

    ref_out1, ref_attn1 = ref_forward(torch_params, x, x, x, num_heads)
    assert out1.shape == (B, S, d_model) and attn1.shape == (B, num_heads, S, S)
    assert jnp.allclose(out1, ref_out1, atol=ATOL, rtol=RTOL)
    assert jnp.allclose(attn1, ref_attn1, atol=ATOL, rtol=RTOL)

    # ---- case 2: cross-attention, distinct q/k/v with Sk != Sq (general path) ----
    Sk = 16
    q_in = jax.random.normal(kq, (B, S, d_model), jnp.float32)
    k_in = jax.random.normal(kk, (B, Sk, d_model), jnp.float32)
    v_in = jax.random.normal(kv, (B, Sk, d_model), jnp.float32)
    out2, attn2 = multi_head_attention(params, q_in, k_in, v_in)
    out2 = jax.block_until_ready(out2)
    attn2 = jax.block_until_ready(attn2)

    ref_out2, ref_attn2 = ref_forward(torch_params, q_in, k_in, v_in, num_heads)
    assert out2.shape == (B, S, d_model) and attn2.shape == (B, num_heads, S, Sk)
    assert jnp.allclose(out2, ref_out2, atol=ATOL, rtol=RTOL)
    assert jnp.allclose(attn2, ref_attn2, atol=ATOL, rtol=RTOL)

    print("KERNEL_OK")
</pallas_src>

<mosaic_0001>
module attributes {stable_mosaic.version = 11 : i64} {
  func.func @_linear_kernel(%arg0: i32, %arg1: i32, %arg2: i32, %arg3: memref<16x32xf32, #tpu.memory_space<vmem>>, %arg4: memref<32x96xbf16, #tpu.memory_space<vmem>>, %arg5: memref<1x96xf32, #tpu.memory_space<vmem>>, %arg6: memref<16x96xbf16, #tpu.memory_space<vmem>>, %arg7: memref<16x96xf32, #tpu.memory_space<vmem>>) attributes {dimension_semantics = [#tpu.dimension_semantics<parallel>, #tpu.dimension_semantics<parallel>, #tpu.dimension_semantics<arbitrary>], iteration_bounds = array<i64: 1, 1, 1>, scalar_prefetch = 0 : i64, scratch_operands = 1 : i64, tpu.core_type = #tpu.core_type<tc>, window_params = [{transform_indices = @transform_0, window_bounds = array<i64: 16, 32>}, {transform_indices = @transform_1, window_bounds = array<i64: 32, 96>}, {transform_indices = @transform_2, window_bounds = array<i64: 1, 96>}, {transform_indices = @transform_3, window_bounds = array<i64: 16, 96>}]} {
    %c0_i32 = arith.constant 0 : i32
    %0 = arith.cmpi eq, %arg2, %c0_i32 : i32
    %1 = arith.extui %0 : i1 to i32
    %c0_i32_0 = arith.constant 0 : i32
    %2 = arith.cmpi ne, %1, %c0_i32_0 : i32
    scf.if %2 {
      %cst_10 = arith.constant 0.000000e+00 : f32
      %13 = vector.broadcast %cst_10 : f32 to vector<16x96xf32>
      %c0_11 = arith.constant 0 : index
      %c0_12 = arith.constant 0 : index
      %14 = vector.load %arg7[%c0_11, %c0_12] : memref<16x96xf32, #tpu.memory_space<vmem>>, vector<16x96xf32>
      tpu.vector_store %arg7[%c0_11, %c0_12], %13 {strides = array<i32>} : memref<16x96xf32, #tpu.memory_space<vmem>>, vector<16x96xf32>,
    } else {
    }
    %c0 = arith.constant 0 : index
    %c0_1 = arith.constant 0 : index
    %3 = vector.load %arg3[%c0, %c0_1] : memref<16x32xf32, #tpu.memory_space<vmem>>, vector<16x32xf32>
    %4 = arith.truncf %3 : vector<16x32xf32> to vector<16x32xbf16>
    %c0_2 = arith.constant 0 : index
    %c0_3 = arith.constant 0 : index
    %5 = vector.load %arg7[%c0_2, %c0_3] : memref<16x96xf32, #tpu.memory_space<vmem>>, vector<16x96xf32>
    %c0_4 = arith.constant 0 : index
    %c0_5 = arith.constant 0 : index
    %6 = vector.load %arg4[%c0_4, %c0_5] : memref<32x96xbf16, #tpu.memory_space<vmem>>, vector<32x96xbf16>
    %cst = arith.constant dense<0.000000e+00> : vector<16x96xf32>
    %7 = tpu.matmul %4, %6, %cst {dimension_numbers = #tpu.dot_dimension_numbers<[1], [0], [0], [1], [0, 0, 1, 1], [], []>} : vector<16x32xbf16>, vector<32x96xbf16>, vector<16x96xf32> -> vector<16x96xf32>
    %8 = arith.addf %5, %7 : vector<16x96xf32>
    %c0_6 = arith.constant 0 : index
    %c0_7 = arith.constant 0 : index
    %9 = vector.load %arg7[%c0_6, %c0_7] : memref<16x96xf32, #tpu.memory_space<vmem>>, vector<16x96xf32>
    tpu.vector_store %arg7[%c0_6, %c0_7], %8 {strides = array<i32>} : memref<16x96xf32, #tpu.memory_space<vmem>>, vector<16x96xf32>,
    %c0_i32_8 = arith.constant 0 : i32
    %10 = arith.cmpi eq, %arg2, %c0_i32_8 : i32
    %11 = arith.extui %10 : i1 to i32
    %c0_i32_9 = arith.constant 0 : i32
    %12 = arith.cmpi ne, %11, %c0_i32_9 : i32
    scf.if %12 {
      %c0_10 = arith.constant 0 : index
      %c0_11 = arith.constant 0 : index
      %13 = vector.load %arg7[%c0_10, %c0_11] : memref<16x96xf32, #tpu.memory_space<vmem>>, vector<16x96xf32>
      %c0_12 = arith.constant 0 : index
      %c0_13 = arith.constant 0 : index
      %14 = vector.load %arg5[%c0_12, %c0_13] : memref<1x96xf32, #tpu.memory_space<vmem>>, vector<1x96xf32>
      %15 = vector.broadcast %14 : vector<1x96xf32> to vector<16x96xf32>
      %16 = arith.addf %13, %15 : vector<16x96xf32>
      %17 = arith.truncf %16 : vector<16x96xf32> to vector<16x96xbf16>
      %c0_14 = arith.constant 0 : index
      %c0_15 = arith.constant 0 : index
      %18 = vector.load %arg6[%c0_14, %c0_15] : memref<16x96xbf16, #tpu.memory_space<vmem>>, vector<16x96xbf16>
      tpu.vector_store %arg6[%c0_14, %c0_15], %17 {strides = array<i32>} : memref<16x96xbf16, #tpu.memory_space<vmem>>, vector<16x96xbf16>,
    } else {
    }
    return
  }
  func.func @transform_0(%arg0: i32, %arg1: i32, %arg2: i32) -> (i32, i32) {
    %c0_i32 = arith.constant 0 : i32
    return %arg0, %arg2 : i32, i32
  }
  func.func @transform_1(%arg0: i32, %arg1: i32, %arg2: i32) -> (i32, i32) {
    %c0_i32 = arith.constant 0 : i32
    return %arg2, %arg1 : i32, i32
  }
  func.func @transform_2(%arg0: i32, %arg1: i32, %arg2: i32) -> (i32, i32) {
    %c0_i32 = arith.constant 0 : i32
    %c0_i32_0 = arith.constant 0 : i32
    return %c0_i32, %arg1 : i32, i32
  }
  func.func @transform_3(%arg0: i32, %arg1: i32, %arg2: i32) -> (i32, i32) {
    %c0_i32 = arith.constant 0 : i32
    return %arg0, %arg1 : i32, i32
  }
}

</mosaic_0001>

<llo_original>
// kernel: tpu_custom_call.1
$region0: #{tpu_custom_call.1}
  #allocation0 [shape = 'u32[]', space=smem, size = 0x4, offset = 0x4, fixed_abs, tag = 'smem constant byte address 0x4 - core index']
  #allocation1 [shape = 'u32[144,128]{1,0:T(1,128)}', space=vmem, size = 0x12000, scoped, tag = 'internal scratch']
  #allocation2 [shape = 'f32[16,96]{1,0:T(8,128)}', space=vmem, size = 0x2000, scoped, tag = 'scratch operand']
  %s0 = inlined_call_operand.hbm [shape: f32[16,32], index: 0, kind: input, shape index: {}]
  %s1 = inlined_call_operand.hbm [shape: bf16[32,96], index: 1, kind: input, shape index: {}]
  %s2 = inlined_call_operand.vmem [shape: f32[1,96], index: 2, kind: input, shape index: {}]
  %s3 = inlined_call_operand.hbm [shape: bf16[16,96], index: 3, kind: output, shape index: {}]
  %s4 = sld [smem:[#allocation0]]
  $region38: #{tpu_custom_call.1} parent=0
    _
  %s6 = ssub.s32 1, %s4
  %s7 = scalar_select 0, %s6, %s4
  $region1: #{tpu_custom_call.1} parent=0
    #allocation3 [shape = 'u8[8192]{0}', space=vmem, size = 0x2000, scoped, tag = 'input window, operand 0, single buffered']
    #allocation4 [shape = 's32[1]{0}', space=sflag, size = 0x4, scoped, tag = 'scoped memory for tpu_custom_call.1']
    #allocation5 [shape = 's32[1]{0}', space=sflag, size = 0x4, scoped, tag = 'scoped memory for tpu_custom_call.1']
    #allocation6 [shape = 'u8[8192]{0}', space=vmem, size = 0x2000, scoped, tag = 'input window, operand 1, single buffered']
    #allocation7 [shape = 's32[1]{0}', space=sflag, size = 0x4, scoped, tag = 'scoped memory for tpu_custom_call.1']
    #allocation8 [shape = 'u8[4096]{0}', space=vmem, size = 0x1000, scoped, tag = 'output window, operand 0, single buffered']
    %8 = vsyncpa [#allocation4], 0
    %9 = vsyncpa [#allocation7], 0
    %10 = vsyncpa [#allocation5], 0
    // Predicated region
    $region2: #{tpu_custom_call.1} parent=1 // pred_check
      _
    $region3: #{tpu_custom_call.1} parent=1 // pred_check_branch
      %12 = sbr.rel (0) target = $region5
    $region4: #{tpu_custom_call.1} parent=1 // pred_region
      %s14 = ssub.s32 256, 256
      %15 = vsyncadd [#allocation4], %s14
      %s16 = sshll.u32 [#allocation3], 4
      %s17 = int_to_ptr.vmem [resolvable:$true] %s16
      %22 = dma.hbm_to_vmem [thread:$0]  %s0, 256, %s17, [#allocation4], 128, 128, 8
    $region5: #{tpu_custom_call.1} parent=1 // pred_fallthru
      _
    // Predicated region
    $region6: #{tpu_custom_call.1} parent=1 // pred_check
      _
    $region7: #{tpu_custom_call.1} parent=1 // pred_check_branch
      %24 = sbr.rel (0) target = $region9
    $region8: #{tpu_custom_call.1} parent=1 // pred_region
      %s26 = ssub.s32 256, 256
      %27 = vsyncadd [#allocation7], %s26
      %s28 = sshll.u32 [#allocation6], 4
      %s29 = int_to_ptr.vmem [resolvable:$true] %s28
      %34 = dma.hbm_to_vmem [thread:$0]  %s1, 256, %s29, [#allocation7], 64, 64, 4
    $region9: #{tpu_custom_call.1} parent=1 // pred_fallthru
      _
    // Predicated region
    $region10: #{tpu_custom_call.1} parent=1 // pred_check
      _
    $region11: #{tpu_custom_call.1} parent=1 // pred_check_branch
      %36 = sbr.rel (0) target = $region13
    $region12: #{tpu_custom_call.1} parent=1 // pred_region
      _
    $region13: #{tpu_custom_call.1} parent=1 // pred_fallthru
      _
    // Predicated region
    $region14: #{tpu_custom_call.1} parent=1 // pred_check
      _
    $region15: #{tpu_custom_call.1} parent=1 // pred_check_branch
      %38 = sbr.rel (0) target = $region17
    $region16: #{tpu_custom_call.1} parent=1 // pred_region
      %39 = dma.done [#allocation4], 256
    $region17: #{tpu_custom_call.1} parent=1 // pred_fallthru
      _
    // Predicated region
    $region18: #{tpu_custom_call.1} parent=1 // pred_check
      _
    $region19: #{tpu_custom_call.1} parent=1 // pred_check_branch
      %41 = sbr.rel (0) target = $region21
    $region20: #{tpu_custom_call.1} parent=1 // pred_region
      %42 = dma.done [#allocation7], 256
    $region21: #{tpu_custom_call.1} parent=1 // pred_fallthru
      _
    %p44 = scmp.eq.s32.totalorder 0, 0
    // Predicated region
    $region22: #{tpu_custom_call.1} parent=1 // pred_check
      %p45 = pneg %p44
    $region23: #{tpu_custom_call.1} parent=1 // pred_check_branch
      %47 = sbr.rel (%p45) target = $region25
    $region24: #{tpu_custom_call.1} parent=1 // pred_region
      %vm48 = vcmask 785408
      %49 = vst.msk [vmem:[#allocation2] sm:$0xff] %vm48, 0.0
      %50 = vst.msk [vmem:[#allocation2 + $0x8] sm:$0xff] %vm48, 0.0
    $region25: #{tpu_custom_call.1} parent=1 // pred_fallthru
      _
    %v51 = vld [vmem:[#allocation3] sm:$0xff]
    %v52 = vld [vmem:[#allocation3 + $0x8] sm:$0xff]
    %v53 = vpack.c.bf16 %v52, %v51
    %v54 = vld [vmem:[#allocation2] sm:$0xff]
    %v55 = vld [vmem:[#allocation2 + $0x8] sm:$0xff]
    %v56 = vld [vmem:[#allocation6] sm:$0xf]
    %v57 = vld [vmem:[#allocation6 + $0x4] sm:$0xf]
    %v58 = vld [vmem:[#allocation6 + $0x8] sm:$0xf]
    %v59 = vld [vmem:[#allocation6 + $0xc] sm:$0xf]
    %v64 = vunpack.c.l.b16 %v56
    %v65 = vunpack.c.l.b16 %v57
    %v66 = vunpack.c.l.b16 %v58
    %v67 = vunpack.c.l.b16 %v59
    %v68 = vpack.c.b16 %v65, %v64
    %v69 = vpack.c.b16 %v67, %v66
    %vm72 = vcmask 261120
    %v74 = vsel %vm72, %v53, 0
    %76 = vmatprep.subr.bf16.mxu0 0
    %77 = vmatpush1.bf16.msra.mxu0 0
    %78 = vmatprep.subr.bf16.mxu0 0
    %79 = vmatpush1.bf16.msra.mxu0 0
    %80 = vmatprep.subr.bf16.mxu0 0
    %81 = vmatpush1.bf16.msra.mxu0 0
    %82 = vmatprep.subr.bf16.mxu0 0
    %83 = vmatpush1.bf16.msra.mxu0 0
    %84 = vmatprep.subr.bf16.mxu0 0
    %85 = vmatpush1.bf16.msra.mxu0 0
    %86 = vmatprep.subr.bf16.mxu0 0
    %87 = vmatpush1.bf16.msra.mxu0 0
    %88 = vmatprep.subr.bf16.mxu0 0
    %89 = vmatpush1.bf16.msra.mxu0 %v69
    %90 = vmatprep.subr.bf16.mxu0 0
    %91 = vmatpush1.bf16.msra.mxu0 %v68
    %92 = vmatprep.subr.bf16.mxu0 0
    %93 = vmatpush2.bf16.msra.mxu0 0
    %94 = vmatprep.subr.bf16.mxu0 0
    %95 = vmatpush2.bf16.msra.mxu0 0
    %96 = vmatprep.subr.bf16.mxu0 0
    %97 = vmatpush2.bf16.msra.mxu0 0
    %98 = vmatprep.subr.bf16.mxu0 0
    %99 = vmatpush2.bf16.msra.mxu0 0
    %100 = vmatprep.subr.bf16.mxu0 0
    %101 = vmatpush2.bf16.msra.mxu0 0
    %102 = vmatprep.subr.bf16.mxu0 0
    %103 = vmatpush2.bf16.msra.mxu0 0
    %104 = vmatprep.subr.bf16.mxu0 0
    %105 = vmatpush2.bf16.msra.mxu0 0
    %106 = vmatprep.subr.bf16.mxu0 0
    %107 = vmatpush2.bf16.msra.mxu0 0
    %108 = vmatprep.mubr.bf16.mxu0 0
    %109 = vmatmul.mubr.bf16.gmra.mxu0 %v74
    %v110 = vpop.f32.mrf.mxu0
    %v111 = vadd.f32 0.0, %v110
    %v112 = vpop.f32.mrf.mxu0
    %v113 = vpop.f32.mrf.mxu0
    %v114 = vadd.f32 0.0, %v113
    %v115 = vpop.f32.mrf.mxu0
    %116 = vdwg.mxu0
    %v117 = vadd.f32 %v54, %v111
    %v118 = vadd.f32 %v55, %v114
    %vm119 = vcmask 785408
    %120 = vst.msk [vmem:[#allocation2] sm:$0xff] %vm119, %v117
    %121 = vst.msk [vmem:[#allocation2 + $0x8] sm:$0xff] %vm119, %v118
    // Predicated region
    $region26: #{tpu_custom_call.1} parent=1 // pred_check
      %p122 = pneg %p44
    $region27: #{tpu_custom_call.1} parent=1 // pred_check_branch
      %124 = sbr.rel (%p122) target = $region29
    $region28: #{tpu_custom_call.1} parent=1 // pred_region
      %v125 = vld [vmem:[#allocation2] sm:$0xff]
      %v126 = vld [vmem:[#allocation2 + $0x8] sm:$0xff]
      %v127 = vld [vmem:[%s2] sm:$0x1]
      %v129 = vlaneseq
      %v130 = vshrl.u32 %v129, 7
      %v131 = vsub.s32 0, %v130
      %v132 = vrot.slane %v127, %v131
      %v134 = vadd.f32 %v125, %v132
      %v135 = vadd.f32 %v126, %v132
      %v136 = vpack.c.bf16 %v135, %v134
      %v138 = vunpack.c.l.b16 %v136
      %v139 = vunpack.c.h.b16 %v136
      %v140 = vpack.c.b16 %v138, %v138
      %v141 = vpack.c.b16 %v139, %v139
      %vm144 = vcmask 781312
      %145 = vst.msk [vmem:[#allocation8] sm:$0xf] %vm144, %v140
      %146 = vst.msk [vmem:[#allocation8 + $0x4] sm:$0xf] %vm144, %v141
    $region29: #{tpu_custom_call.1} parent=1 // pred_fallthru
      _
    // Predicated region
    $region30: #{tpu_custom_call.1} parent=1 // pred_check
      _
    $region31: #{tpu_custom_call.1} parent=1 // pred_check_branch
      %148 = sbr.rel (0) target = $region33
    $region32: #{tpu_custom_call.1} parent=1 // pred_region
      %s150 = ssub.s32 128, 128
      %151 = vsyncadd [#allocation5], %s150
      %s152 = sshll.u32 [#allocation8], 4
      %s153 = int_to_ptr.vmem [resolvable:$true] %s152
      %158 = dma.vmem_to_hbm [thread:$0]  %s153, 128, %s3, [#allocation5], 64, 64, 4
    $region33: #{tpu_custom_call.1} parent=1 // pred_fallthru
      _
    // Predicated region
    $region34: #{tpu_custom_call.1} parent=1 // pred_check
      _
    $region35: #{tpu_custom_call.1} parent=1 // pred_check_branch
      %160 = sbr.rel (0) target = $region37
    $region36: #{tpu_custom_call.1} parent=1 // pred_region
      %161 = dma.done [#allocation5], 128
    $region37: #{tpu_custom_call.1} parent=1 // pred_fallthru
      _
    %162 = vsyncpa [#allocation4], 1
    %163 = vsyncpa [#allocation7], 1
    %164 = vsyncpa [#allocation5], 1

</llo_original>
